<compile_context>
chip_gen: v6e
topology: v6e:2x2x1
jax: 0.10.0
libtpu: 0.0.40
codegen_flags: <defaults>
</compile_context>

<pallas_src>
import functools

import jax
import jax.numpy as jnp
from jax.experimental import pallas as pl
from jax.experimental.pallas import tpu as pltpu


def _round_up(n, m):
    return ((n + m - 1) // m) * m


# -----------------------------------------------------------------------------
# Kernel: one fused actor+critic MLP step on a (tm, s_pad) batch tile.
# -----------------------------------------------------------------------------
def _policy_fused_kernel(x_ref, w_ref, b_ref, out_ref, *, s_pad, h2, out_w,
                         act_dtype):
    # w_ref packs [W1 (s_pad, 2H); W2 (2H, 2H); W3 (2H, 2H)] along rows.
    # b_ref packs [b1; b2; b3] as (3, 2H) f32 (b3 zero beyond col A+1).
    x = x_ref[...].astype(w_ref.dtype)               # cast to MXU operand dtype
    w1 = w_ref[0:s_pad, :]
    w2 = w_ref[s_pad:s_pad + h2, :]
    w3 = w_ref[s_pad + h2:s_pad + 2 * h2, :]
    b1 = b_ref[0:1, :]
    b2 = b_ref[1:2, :]
    b3 = b_ref[2:3, :]

    # fc1 (actor | critic concatenated along output lanes); f32 accumulate,
    # f32 bias add, tanh in act_dtype (bf16 on v6e/v7x fast path, f32 else).
    h = jnp.dot(x, w1, preferred_element_type=jnp.float32) + b1
    h = jnp.tanh(h.astype(act_dtype)).astype(w_ref.dtype)
    # fc2 (block-diagonal -> one matmul evaluates both towers)
    h = jnp.dot(h, w2, preferred_element_type=jnp.float32) + b2
    h = jnp.tanh(h.astype(act_dtype)).astype(w_ref.dtype)
    # fc3 (block-diagonal: cols [0:A] = action_mean, col A = state_value).
    out = jnp.dot(h, w3, preferred_element_type=jnp.float32) + b3
    # Only the first out_w (= round_up(A+1, 8)) lanes are useful -> narrow
    # writeback; the rest of the 128 lanes never leave VMEM.
    out_ref[...] = out[:, :out_w].astype(out_ref.dtype)


# -----------------------------------------------------------------------------
# Parameter init (matches Policy.init_weights: N(0,1) weights, zero biases,
# sigma = 0.5).  Weights stored PyTorch-style (out, in).
# -----------------------------------------------------------------------------
def init_policy_params(key, state_space, action_space, hidden=64):
    ks = jax.random.split(key, 6)
    return {
        "fc1_actor_w": jax.random.normal(ks[0], (hidden, state_space), jnp.float32),
        "fc1_actor_b": jnp.zeros((hidden,), jnp.float32),
        "fc2_actor_w": jax.random.normal(ks[1], (hidden, hidden), jnp.float32),
        "fc2_actor_b": jnp.zeros((hidden,), jnp.float32),
        "fc3_actor_mean_w": jax.random.normal(ks[2], (action_space, hidden), jnp.float32),
        "fc3_actor_mean_b": jnp.zeros((action_space,), jnp.float32),
        "sigma": jnp.full((action_space,), 0.5, jnp.float32),
        "fc1_critic_w": jax.random.normal(ks[3], (hidden, state_space), jnp.float32),
        "fc1_critic_b": jnp.zeros((hidden,), jnp.float32),
        "fc2_critic_w": jax.random.normal(ks[4], (hidden, hidden), jnp.float32),
        "fc2_critic_b": jnp.zeros((hidden,), jnp.float32),
        "fc3_critic_value_w": jax.random.normal(ks[5], (1, hidden), jnp.float32),
        "fc3_critic_value_b": jnp.zeros((1,), jnp.float32),
    }


# -----------------------------------------------------------------------------
# One-time packing: PyTorch (out, in) weights -> fused (in, out) slab,
# block-diagonal fc2/fc3, packed biases, hoisted softplus(sigma).
#
# compute_dtype: MXU operand dtype (bf16 recommended on all generations).
# act_dtype:     tanh dtype; defaults to compute_dtype.  On v5e (no bf16
#                VPU/EUP) pass act_dtype=jnp.float32 while keeping bf16 MXU
#                operands.
# -----------------------------------------------------------------------------
def pack_policy_params(params, compute_dtype=jnp.float32, act_dtype=None):
    if act_dtype is None:
        act_dtype = compute_dtype
    H, S = params["fc1_actor_w"].shape
    A = params["fc3_actor_mean_w"].shape[0]
    H2 = 2 * H
    S_pad = _round_up(S, 8)
    out_w = min(H2, _round_up(A + 1, 8))

    w1 = jnp.zeros((S_pad, H2), jnp.float32)
    w1 = w1.at[:S, :H].set(params["fc1_actor_w"].T)
    w1 = w1.at[:S, H:].set(params["fc1_critic_w"].T)

    w2 = jnp.zeros((H2, H2), jnp.float32)
    w2 = w2.at[:H, :H].set(params["fc2_actor_w"].T)
    w2 = w2.at[H:, H:].set(params["fc2_critic_w"].T)

    w3 = jnp.zeros((H2, H2), jnp.float32)
    w3 = w3.at[:H, :A].set(params["fc3_actor_mean_w"].T)
    w3 = w3.at[H:, A:A + 1].set(params["fc3_critic_value_w"].T)

    w_slab = jnp.concatenate([w1, w2, w3], axis=0).astype(compute_dtype)

    b = jnp.zeros((3, H2), jnp.float32)
    b = b.at[0, :H].set(params["fc1_actor_b"])
    b = b.at[0, H:].set(params["fc1_critic_b"])
    b = b.at[1, :H].set(params["fc2_actor_b"])
    b = b.at[1, H:].set(params["fc2_critic_b"])
    b = b.at[2, :A].set(params["fc3_actor_mean_b"])
    b = b.at[2, A:A + 1].set(params["fc3_critic_value_b"])

    # Hoisted out of the kernel: depends only on params, computed once.
    sigma = jax.nn.softplus(params["sigma"])

    return {
        "w": w_slab,
        "b": b,
        "sigma": sigma,
        "state_pad": S_pad,
        "hidden": H,
        "action_space": A,
        "out_w": out_w,
        "act_dtype_name": jnp.dtype(act_dtype).name,
    }


# -----------------------------------------------------------------------------
# Jitted forward wrapper.
# -----------------------------------------------------------------------------
@functools.partial(
    jax.jit,
    static_argnames=("state_pad", "hidden", "action_space", "out_w", "act_dtype_name"),
)
def _policy_forward_impl(x, w, b, sigma, *, state_pad, hidden, action_space,
                         out_w, act_dtype_name):
    B, S = x.shape
    H2 = 2 * hidden
    A = action_space
    act_dtype = jnp.dtype(act_dtype_name)

    # Only pad the (narrow) state dim if it is not already sublane-aligned.
    xp = x
    if S != state_pad:
        xp = jnp.pad(xp, ((0, 0), (0, state_pad - S)))

    # Batch tile selection (kernel is overhead / HBM-writeback bound):
    #   - small B: one block, rounded to a sublane multiple (no wrapper pad;
    #     Pallas masks the overhang).
    #   - mid B:   two blocks so the "parallel" batch axis shards across both
    #     v7x TensorCores.
    #   - huge B:  2048-row tiles (well past the per-step overhead knee,
    #     still only ~0.5 MiB of double-buffered VMEM).
    sub = 8
    if B <= 256:
        tm = _round_up(B, sub)
    elif B <= 4096:
        tm = _round_up(pl.cdiv(B, 2), sub)
    else:
        tm = 2048
    grid = (pl.cdiv(B, tm),)

    flops = 2 * B * (state_pad * H2 + 2 * H2 * H2)
    transcendentals = 2 * B * H2
    bytes_accessed = (
        xp.size * xp.dtype.itemsize
        + w.size * w.dtype.itemsize
        + b.size * b.dtype.itemsize
        + B * out_w * 4
    )

    kernel = functools.partial(
        _policy_fused_kernel, s_pad=state_pad, h2=H2, out_w=out_w,
        act_dtype=act_dtype)

    out = pl.pallas_call(
        kernel,
        out_shape=jax.ShapeDtypeStruct((B, out_w), jnp.float32),
        grid=grid,
        in_specs=[
            pl.BlockSpec((tm, state_pad), lambda i: (i, 0)),            # x tile
            pl.BlockSpec((state_pad + 2 * H2, H2), lambda i: (0, 0)),   # weights (resident)
            pl.BlockSpec((3, H2), lambda i: (0, 0)),                    # biases (resident)
        ],
        out_specs=pl.BlockSpec((tm, out_w), lambda i: (i, 0)),
        compiler_params=pltpu.CompilerParams(dimension_semantics=("parallel",)),
        cost_estimate=pl.CostEstimate(
            flops=flops, transcendentals=transcendentals,
            bytes_accessed=bytes_accessed),
    )(xp, w, b)

    # `out` is only (B, out_w=8): these slices are negligible.
    action_mean = out[:, :A]
    state_value = out[:, A]
    return action_mean, sigma, state_value


def policy_forward(x, packed):
    """Returns (action_mean (B, A), sigma (A,), state_value (B,))."""
    return _policy_forward_impl(
        x, packed["w"], packed["b"], packed["sigma"],
        state_pad=packed["state_pad"],
        hidden=packed["hidden"],
        action_space=packed["action_space"],
        out_w=packed["out_w"],
        act_dtype_name=packed["act_dtype_name"],
    )


# -----------------------------------------------------------------------------
# Pure-JAX reference mirroring the PyTorch module (f32).
# -----------------------------------------------------------------------------
def _reference_forward(x, p):
    ha = jnp.tanh(x @ p["fc1_actor_w"].T + p["fc1_actor_b"])
    ha = jnp.tanh(ha @ p["fc2_actor_w"].T + p["fc2_actor_b"])
    mean = ha @ p["fc3_actor_mean_w"].T + p["fc3_actor_mean_b"]
    sigma = jax.nn.softplus(p["sigma"])
    hc = jnp.tanh(x @ p["fc1_critic_w"].T + p["fc1_critic_b"])
    hc = jnp.tanh(hc @ p["fc2_critic_w"].T + p["fc2_critic_b"])
    value = (hc @ p["fc3_critic_value_w"].T + p["fc3_critic_value_b"]).squeeze(-1)
    return mean, sigma, value


if __name__ == "__main__":
    STATE, ACTION, HIDDEN = 16, 4, 64
    key = jax.random.PRNGKey(0)
    k_param, k_x1, k_x2 = jax.random.split(key, 3)

    params = init_policy_params(k_param, STATE, ACTION, hidden=HIDDEN)

    # --- f32 path, small batch (single block): exact check vs reference. ---
    B = 8
    x = jax.random.normal(k_x1, (B, STATE), jnp.float32)
    packed = pack_policy_params(params, compute_dtype=jnp.float32)
    mean, sigma, value = jax.block_until_ready(policy_forward(x, packed))

    mean_r, sigma_r, value_r = _reference_forward(x, params)
    assert mean.shape == (B, ACTION) and sigma.shape == (ACTION,) and value.shape == (B,)
    assert jnp.allclose(mean, mean_r, atol=2e-4, rtol=2e-4)
    assert jnp.allclose(sigma, sigma_r, atol=1e-5, rtol=1e-5)
    assert jnp.allclose(value, value_r, atol=2e-4, rtol=2e-4)

    # --- f32 path, ragged multi-block batch (grid of 2, masked last block). ---
    B2 = 300
    x2 = jax.random.normal(k_x2, (B2, STATE), jnp.float32)
    mean2, _, value2 = jax.block_until_ready(policy_forward(x2, packed))
    mean2_r, _, value2_r = _reference_forward(x2, params)
    assert mean2.shape == (B2, ACTION) and value2.shape == (B2,)
    assert jnp.allclose(mean2, mean2_r, atol=2e-4, rtol=2e-4)
    assert jnp.allclose(value2, value2_r, atol=2e-4, rtol=2e-4)

    # --- bf16 MXU path (v6e/v7x fast path: bf16 operands + bf16 tanh,
    #     f32 accumulation).  Loose-tolerance check vs the f32 reference. ---
    packed_bf16 = pack_policy_params(params, compute_dtype=jnp.bfloat16)
    mean_b, sigma_b, value_b = jax.block_until_ready(policy_forward(x, packed_bf16))
    assert mean_b.shape == (B, ACTION) and value_b.shape == (B,)
    assert bool(jnp.all(jnp.isfinite(mean_b))) and bool(jnp.all(jnp.isfinite(value_b)))

    def _rel_rms(a, b):
        return float(jnp.sqrt(jnp.mean((a - b) ** 2))
                     / (jnp.sqrt(jnp.mean(b ** 2)) + 1e-6))

    assert _rel_rms(mean_b, mean_r) < 0.2
    assert _rel_rms(value_b, value_r) < 0.2

    # TODO(synk): torch.distributions.Normal itself has no kernel equivalent;
    # the kernel returns its parameters (action_mean, sigma).
    print("KERNEL_OK")
</pallas_src>

<mosaic_0001>
module attributes {stable_mosaic.version = 11 : i64} {
  func.func @_policy_fused_kernel(%arg0: i32, %arg1: memref<8x16xf32, #tpu.memory_space<vmem>>, %arg2: memref<272x128xf32, #tpu.memory_space<vmem>>, %arg3: memref<3x128xf32, #tpu.memory_space<vmem>>, %arg4: memref<8x8xf32, #tpu.memory_space<vmem>>) attributes {dimension_semantics = [#tpu.dimension_semantics<parallel>], iteration_bounds = array<i64: 1>, scalar_prefetch = 0 : i64, scratch_operands = 0 : i64, tpu.core_type = #tpu.core_type<tc>, window_params = [{transform_indices = @transform_0, window_bounds = array<i64: 8, 16>}, {pipeline_mode = #tpu.pipeline_mode<synchronous>, transform_indices = @transform_1, window_bounds = array<i64: 272, 128>}, {pipeline_mode = #tpu.pipeline_mode<synchronous>, transform_indices = @transform_2, window_bounds = array<i64: 3, 128>}, {transform_indices = @transform_3, window_bounds = array<i64: 8, 8>}]} {
    %c0 = arith.constant 0 : index
    %c0_0 = arith.constant 0 : index
    %0 = vector.load %arg1[%c0, %c0_0] : memref<8x16xf32, #tpu.memory_space<vmem>>, vector<8x16xf32>
    %c0_1 = arith.constant 0 : index
    %c0_2 = arith.constant 0 : index
    %1 = vector.load %arg2[%c0_1, %c0_2] : memref<272x128xf32, #tpu.memory_space<vmem>>, vector<16x128xf32>
    %c16 = arith.constant 16 : index
    %c0_3 = arith.constant 0 : index
    %2 = vector.load %arg2[%c16, %c0_3] : memref<272x128xf32, #tpu.memory_space<vmem>>, vector<128x128xf32>
    %c144 = arith.constant 144 : index
    %c0_4 = arith.constant 0 : index
    %3 = vector.load %arg2[%c144, %c0_4] : memref<272x128xf32, #tpu.memory_space<vmem>>, vector<128x128xf32>
    %c0_5 = arith.constant 0 : index
    %c0_6 = arith.constant 0 : index
    %4 = vector.load %arg3[%c0_5, %c0_6] : memref<3x128xf32, #tpu.memory_space<vmem>>, vector<1x128xf32>
    %c1 = arith.constant 1 : index
    %c0_7 = arith.constant 0 : index
    %5 = vector.load %arg3[%c1, %c0_7] : memref<3x128xf32, #tpu.memory_space<vmem>>, vector<1x128xf32>
    %c2 = arith.constant 2 : index
    %c0_8 = arith.constant 0 : index
    %6 = vector.load %arg3[%c2, %c0_8] : memref<3x128xf32, #tpu.memory_space<vmem>>, vector<1x128xf32>
    %cst = arith.constant dense<0.000000e+00> : vector<8x128xf32>
    %7 = tpu.matmul %0, %1, %cst {dimension_numbers = #tpu.dot_dimension_numbers<[1], [0], [0], [1], [0, 0, 1, 1], [], []>} : vector<8x16xf32>, vector<16x128xf32>, vector<8x128xf32> -> vector<8x128xf32>
    %8 = vector.broadcast %4 : vector<1x128xf32> to vector<8x128xf32>
    %9 = arith.addf %7, %8 : vector<8x128xf32>
    %10 = math.tanh %9 : vector<8x128xf32>
    %cst_9 = arith.constant dense<0.000000e+00> : vector<8x128xf32>
    %11 = tpu.matmul %10, %2, %cst_9 {dimension_numbers = #tpu.dot_dimension_numbers<[1], [0], [0], [1], [0, 0, 1, 1], [], []>} : vector<8x128xf32>, vector<128x128xf32>, vector<8x128xf32> -> vector<8x128xf32>
    %12 = vector.broadcast %5 : vector<1x128xf32> to vector<8x128xf32>
    %13 = arith.addf %11, %12 : vector<8x128xf32>
    %14 = math.tanh %13 : vector<8x128xf32>
    %cst_10 = arith.constant dense<0.000000e+00> : vector<8x128xf32>
    %15 = tpu.matmul %14, %3, %cst_10 {dimension_numbers = #tpu.dot_dimension_numbers<[1], [0], [0], [1], [0, 0, 1, 1], [], []>} : vector<8x128xf32>, vector<128x128xf32>, vector<8x128xf32> -> vector<8x128xf32>
    %16 = vector.broadcast %6 : vector<1x128xf32> to vector<8x128xf32>
    %17 = arith.addf %15, %16 : vector<8x128xf32>
    %18 = vector.extract_strided_slice %17 {offsets = [0, 0], sizes = [8, 8], strides = [1, 1]} : vector<8x128xf32> to vector<8x8xf32>
    %c0_11 = arith.constant 0 : index
    %c0_12 = arith.constant 0 : index
    %19 = vector.load %arg4[%c0_11, %c0_12] : memref<8x8xf32, #tpu.memory_space<vmem>>, vector<8x8xf32>
    tpu.vector_store %arg4[%c0_11, %c0_12], %18 {strides = array<i32>} : memref<8x8xf32, #tpu.memory_space<vmem>>, vector<8x8xf32>,
    return
  }
  func.func @transform_0(%arg0: i32) -> (i32, i32) {
    %c0_i32 = arith.constant 0 : i32
    %c0_i32_0 = arith.constant 0 : i32
    return %arg0, %c0_i32 : i32, i32
  }
  func.func @transform_1(%arg0: i32) -> (i32, i32) {
    %c0_i32 = arith.constant 0 : i32
    %c0_i32_0 = arith.constant 0 : i32
    %c0_i32_1 = arith.constant 0 : i32
    return %c0_i32, %c0_i32_0 : i32, i32
  }
  func.func @transform_2(%arg0: i32) -> (i32, i32) {
    %c0_i32 = arith.constant 0 : i32
    %c0_i32_0 = arith.constant 0 : i32
    %c0_i32_1 = arith.constant 0 : i32
    return %c0_i32, %c0_i32_0 : i32, i32
  }
  func.func @transform_3(%arg0: i32) -> (i32, i32) {
    %c0_i32 = arith.constant 0 : i32
    %c0_i32_0 = arith.constant 0 : i32
    return %arg0, %c0_i32 : i32, i32
  }
}

</mosaic_0001>

<llo_original>
// kernel: _policy_forward_impl.1
$region0: #{_policy_forward_impl.1}
  #allocation0 [shape = 'u32[]', space=smem, size = 0x4, offset = 0x4, fixed_abs, tag = 'smem constant byte address 0x4 - core index']
  #allocation1 [shape = 'u32[144,128]{1,0:T(1,128)}', space=vmem, size = 0x12000, scoped, tag = 'internal scratch']
  %s0 = inlined_call_operand.hbm [shape: f32[8,16], index: 0, kind: input, shape index: {}]
  %s1 = inlined_call_operand.hbm [shape: f32[272,128], index: 1, kind: input, shape index: {}]
  %s2 = inlined_call_operand.vmem [shape: f32[3,128], index: 2, kind: input, shape index: {}]
  %s3 = inlined_call_operand.vmem [shape: f32[8,8], index: 3, kind: output, shape index: {}]
  %s4 = sld [smem:[#allocation0]]
  $region30: #{_policy_forward_impl.1} parent=0
    _
  %s6 = ssub.s32 1, %s4
  %s7 = scalar_select 0, %s6, %s4
  $region1: #{_policy_forward_impl.1} parent=0
    #allocation2 [shape = 'u8[4096]{0}', space=vmem, size = 0x1000, scoped, tag = 'input window, operand 0, single buffered']
    #allocation3 [shape = 's32[1]{0}', space=sflag, size = 0x4, scoped, tag = 'scoped memory for _policy_forward_impl.1']
    #allocation4 [shape = 'u8[139264]{0}', space=vmem, size = 0x22000, scoped, tag = 'input window, operand 1, single buffered']
    #allocation5 [shape = 's32[1]{0}', space=sflag, size = 0x4, scoped, tag = 'scoped memory for _policy_forward_impl.1']
    %8 = vsyncpa [#allocation3], 0
    %9 = vsyncpa [#allocation5], 0
    // Predicated region
    $region2: #{_policy_forward_impl.1} parent=1 // pred_check
      _
    $region3: #{_policy_forward_impl.1} parent=1 // pred_check_branch
      %11 = sbr.rel (0) target = $region5
    $region4: #{_policy_forward_impl.1} parent=1 // pred_region
      %s13 = ssub.s32 128, 128
      %14 = vsyncadd [#allocation3], %s13
      %s16 = sshll.u32 [#allocation2], 4
      %s17 = int_to_ptr.vmem [resolvable:$true] %s16
      %19 = dma.hbm_to_vmem [thread:$0]  %s0, 128, %s17, [#allocation3]
    $region5: #{_policy_forward_impl.1} parent=1 // pred_fallthru
      _
    // Predicated region
    $region6: #{_policy_forward_impl.1} parent=1 // pred_check
      _
    $region7: #{_policy_forward_impl.1} parent=1 // pred_check_branch
      %21 = sbr.rel (0) target = $region9
    $region8: #{_policy_forward_impl.1} parent=1 // pred_region
      %s23 = ssub.s32 4352, 4352
      %24 = vsyncadd [#allocation5], %s23
      %s25 = sshll.u32 [#allocation4], 4
      %s26 = int_to_ptr.vmem [resolvable:$true] %s25
      %31 = dma.hbm_to_vmem [thread:$0]  %s1, 4352, %s26, [#allocation5], 128, 128, 8
    $region9: #{_policy_forward_impl.1} parent=1 // pred_fallthru
      _
    // Predicated region
    $region10: #{_policy_forward_impl.1} parent=1 // pred_check
      _
    $region11: #{_policy_forward_impl.1} parent=1 // pred_check_branch
      %33 = sbr.rel (0) target = $region13
    $region12: #{_policy_forward_impl.1} parent=1 // pred_region
      _
    $region13: #{_policy_forward_impl.1} parent=1 // pred_fallthru
      _
    // Predicated region
    $region14: #{_policy_forward_impl.1} parent=1 // pred_check
      _
    $region15: #{_policy_forward_impl.1} parent=1 // pred_check_branch
      %35 = sbr.rel (0) target = $region17
    $region16: #{_policy_forward_impl.1} parent=1 // pred_region
      %36 = dma.done [#allocation3], 128
    $region17: #{_policy_forward_impl.1} parent=1 // pred_fallthru
      _
    // Predicated region
    $region18: #{_policy_forward_impl.1} parent=1 // pred_check
      _
    $region19: #{_policy_forward_impl.1} parent=1 // pred_check_branch
      %38 = sbr.rel (0) target = $region21
    $region20: #{_policy_forward_impl.1} parent=1 // pred_region
      %39 = dma.done [#allocation5], 4352
    $region21: #{_policy_forward_impl.1} parent=1 // pred_fallthru
      _
    %v40 = vld [vmem:[#allocation2] sm:$0xff]
    %v41 = vld [vmem:[#allocation4] sm:$0xff]
    %v42 = vld [vmem:[#allocation4 + $0x8] sm:$0xff]
    %v43 = vld [vmem:[#allocation4 + $0x10] sm:$0xff]
    %v44 = vld [vmem:[#allocation4 + $0x18] sm:$0xff]
    %v45 = vld [vmem:[#allocation4 + $0x20] sm:$0xff]
    %v46 = vld [vmem:[#allocation4 + $0x28] sm:$0xff]
    %v47 = vld [vmem:[#allocation4 + $0x30] sm:$0xff]
    %v48 = vld [vmem:[#allocation4 + $0x38] sm:$0xff]
    %v49 = vld [vmem:[#allocation4 + $0x40] sm:$0xff]
    %v50 = vld [vmem:[#allocation4 + $0x48] sm:$0xff]
    %v51 = vld [vmem:[#allocation4 + $0x50] sm:$0xff]
    %v52 = vld [vmem:[#allocation4 + $0x58] sm:$0xff]
    %v53 = vld [vmem:[#allocation4 + $0x60] sm:$0xff]
    %v54 = vld [vmem:[#allocation4 + $0x68] sm:$0xff]
    %v55 = vld [vmem:[#allocation4 + $0x70] sm:$0xff]
    %v56 = vld [vmem:[#allocation4 + $0x78] sm:$0xff]
    %v57 = vld [vmem:[#allocation4 + $0x80] sm:$0xff]
    %v58 = vld [vmem:[#allocation4 + $0x88] sm:$0xff]
    %v59 = vld [vmem:[#allocation4 + $0x90] sm:$0xff]
    %v60 = vld [vmem:[#allocation4 + $0x98] sm:$0xff]
    %v61 = vld [vmem:[#allocation4 + $0xa0] sm:$0xff]
    %v62 = vld [vmem:[#allocation4 + $0xa8] sm:$0xff]
    %v63 = vld [vmem:[#allocation4 + $0xb0] sm:$0xff]
    %v64 = vld [vmem:[#allocation4 + $0xb8] sm:$0xff]
    %v65 = vld [vmem:[#allocation4 + $0xc0] sm:$0xff]
    %v66 = vld [vmem:[#allocation4 + $0xc8] sm:$0xff]
    %v67 = vld [vmem:[#allocation4 + $0xd0] sm:$0xff]
    %v68 = vld [vmem:[#allocation4 + $0xd8] sm:$0xff]
    %v69 = vld [vmem:[#allocation4 + $0xe0] sm:$0xff]
    %v70 = vld [vmem:[#allocation4 + $0xe8] sm:$0xff]
    %v71 = vld [vmem:[#allocation4 + $0xf0] sm:$0xff]
    %v72 = vld [vmem:[#allocation4 + $0xf8] sm:$0xff]
    %v73 = vld [vmem:[#allocation4 + $0x100] sm:$0xff]
    %v74 = vld [vmem:[#allocation4 + $0x108] sm:$0xff]
    %v75 = vld [vmem:[%s2] sm:$0x1]
    %v76 = vld [vmem:[%s2 + $0x1] sm:$0x1]
    %v77 = vld [vmem:[%s2 + $0x2] sm:$0x1]
    %v78 = vlaneseq
    %v79 = vshrl.u32 %v78, 7
    %v80 = vsub.s32 0, %v79
    %v81 = vrot.slane %v75, %v80
    %vm82 = vcmask 130048
    %v84 = vsel %vm82, %v40, 0
    %86 = vmatprep.subr.mxu0 0.0
    %87 = vmatpush1.msra.mxu0 0.0
    %88 = vmatprep.subr.mxu0 0.0
    %89 = vmatpush1.msra.mxu0 0.0
    %90 = vmatprep.subr.mxu0 0.0
    %91 = vmatpush1.msra.mxu0 0.0
    %92 = vmatprep.subr.mxu0 0.0
    %93 = vmatpush1.msra.mxu0 0.0
    %94 = vmatprep.subr.mxu0 0.0
    %95 = vmatpush1.msra.mxu0 0.0
    %96 = vmatprep.subr.mxu0 0.0
    %97 = vmatpush1.msra.mxu0 0.0
    %98 = vmatprep.subr.mxu0 0.0
    %99 = vmatpush1.msra.mxu0 0.0
    %100 = vmatprep.subr.mxu0 0.0
    %101 = vmatpush1.msra.mxu0 0.0
    %102 = vmatprep.subr.mxu0 0.0
    %103 = vmatpush1.msra.mxu0 0.0
    %104 = vmatprep.subr.mxu0 0.0
    %105 = vmatpush1.msra.mxu0 0.0
    %106 = vmatprep.subr.mxu0 0.0
    %107 = vmatpush1.msra.mxu0 0.0
    %108 = vmatprep.subr.mxu0 0.0
    %109 = vmatpush1.msra.mxu0 0.0
    %110 = vmatprep.subr.mxu0 0.0
    %111 = vmatpush1.msra.mxu0 0.0
    %112 = vmatprep.subr.mxu0 0.0
    %113 = vmatpush1.msra.mxu0 0.0
    %114 = vmatprep.subr.mxu0 0.0
    %115 = vmatpush1.msra.mxu0 %v42
    %116 = vmatprep.subr.mxu0 0.0
    %117 = vmatpush1.msra.mxu0 %v41
    %118 = vmatprep.subr.mxu0 0.0
    %119 = vmatpush2.msra.mxu0 0.0
    %120 = vmatprep.subr.mxu0 0.0
    %121 = vmatpush2.msra.mxu0 0.0
    %122 = vmatprep.subr.mxu0 0.0
    %123 = vmatpush2.msra.mxu0 0.0
    %124 = vmatprep.subr.mxu0 0.0
    %125 = vmatpush2.msra.mxu0 0.0
    %126 = vmatprep.subr.mxu0 0.0
    %127 = vmatpush2.msra.mxu0 0.0
    %128 = vmatprep.subr.mxu0 0.0
    %129 = vmatpush2.msra.mxu0 0.0
    %130 = vmatprep.subr.mxu0 0.0
    %131 = vmatpush2.msra.mxu0 0.0
    %132 = vmatprep.subr.mxu0 0.0
    %133 = vmatpush2.msra.mxu0 0.0
    %134 = vmatprep.subr.mxu0 0.0
    %135 = vmatpush2.msra.mxu0 0.0
    %136 = vmatprep.subr.mxu0 0.0
    %137 = vmatpush2.msra.mxu0 0.0
    %138 = vmatprep.subr.mxu0 0.0
    %139 = vmatpush2.msra.mxu0 0.0
    %140 = vmatprep.subr.mxu0 0.0
    %141 = vmatpush2.msra.mxu0 0.0
    %142 = vmatprep.subr.mxu0 0.0
    %143 = vmatpush2.msra.mxu0 0.0
    %144 = vmatprep.subr.mxu0 0.0
    %145 = vmatpush2.msra.mxu0 0.0
    %146 = vmatprep.subr.mxu0 0.0
    %147 = vmatpush2.msra.mxu0 0.0
    %148 = vmatprep.subr.mxu0 0.0
    %149 = vmatpush2.msra.mxu0 0.0
    %150 = vmatprep.mubr.f32.mxu0 0.0
    %151 = vmatmul.mubr.f32.gmra.mxu0 %v84
    %v152 = vpop.f32.mrf.mxu0
    %v153 = vadd.f32 %v81, %v152
    %v154 = vpop.f32.mrf.mxu0
    %155 = vdwg.mxu0
    %v156 = vtanh.pop %v153
    %v157 = vlaneseq
    %v158 = vshrl.u32 %v157, 7
    %v159 = vsub.s32 0, %v158
    %v160 = vrot.slane %v76, %v159
    %161 = vmatprep.subr.mxu0 0.0
    %162 = vmatpush1.msra.mxu0 %v58
    %163 = vmatprep.subr.mxu0 0.0
    %164 = vmatpush1.msra.mxu0 %v57
    %165 = vmatprep.subr.mxu0 0.0
    %166 = vmatpush1.msra.mxu0 %v56
    %167 = vmatprep.subr.mxu0 0.0
    %168 = vmatpush1.msra.mxu0 %v55
    %169 = vmatprep.subr.mxu0 0.0
    %170 = vmatpush1.msra.mxu0 %v54
    %171 = vmatprep.subr.mxu0 0.0
    %172 = vmatpush1.msra.mxu0 %v53
    %173 = vmatprep.subr.mxu0 0.0
    %174 = vmatpush1.msra.mxu0 %v52
    %175 = vmatprep.subr.mxu0 0.0
    %176 = vmatpush1.msra.mxu0 %v51
    %177 = vmatprep.subr.mxu0 0.0
    %178 = vmatpush1.msra.mxu0 %v50
    %179 = vmatprep.subr.mxu0 0.0
    %180 = vmatpush1.msra.mxu0 %v49
    %181 = vmatprep.subr.mxu0 0.0
    %182 = vmatpush1.msra.mxu0 %v48
    %183 = vmatprep.subr.mxu0 0.0
    %184 = vmatpush1.msra.mxu0 %v47
    %185 = vmatprep.subr.mxu0 0.0
    %186 = vmatpush1.msra.mxu0 %v46
    %187 = vmatprep.subr.mxu0 0.0
    %188 = vmatpush1.msra.mxu0 %v45
    %189 = vmatprep.subr.mxu0 0.0
    %190 = vmatpush1.msra.mxu0 %v44
    %191 = vmatprep.subr.mxu0 0.0
    %192 = vmatpush1.msra.mxu0 %v43
    %193 = vmatprep.subr.mxu0 0.0
    %194 = vmatpush2.msra.mxu0 0.0
    %195 = vmatprep.subr.mxu0 0.0
    %196 = vmatpush2.msra.mxu0 0.0
    %197 = vmatprep.subr.mxu0 0.0
    %198 = vmatpush2.msra.mxu0 0.0
    %199 = vmatprep.subr.mxu0 0.0
    %200 = vmatpush2.msra.mxu0 0.0
    %201 = vmatprep.subr.mxu0 0.0
    %202 = vmatpush2.msra.mxu0 0.0
    %203 = vmatprep.subr.mxu0 0.0
    %204 = vmatpush2.msra.mxu0 0.0
    %205 = vmatprep.subr.mxu0 0.0
    %206 = vmatpush2.msra.mxu0 0.0
    %207 = vmatprep.subr.mxu0 0.0
    %208 = vmatpush2.msra.mxu0 0.0
    %209 = vmatprep.subr.mxu0 0.0
    %210 = vmatpush2.msra.mxu0 0.0
    %211 = vmatprep.subr.mxu0 0.0
    %212 = vmatpush2.msra.mxu0 0.0
    %213 = vmatprep.subr.mxu0 0.0
    %214 = vmatpush2.msra.mxu0 0.0
    %215 = vmatprep.subr.mxu0 0.0
    %216 = vmatpush2.msra.mxu0 0.0
    %217 = vmatprep.subr.mxu0 0.0
    %218 = vmatpush2.msra.mxu0 0.0
    %219 = vmatprep.subr.mxu0 0.0
    %220 = vmatpush2.msra.mxu0 0.0
    %221 = vmatprep.subr.mxu0 0.0
    %222 = vmatpush2.msra.mxu0 0.0
    %223 = vmatprep.subr.mxu0 0.0
    %224 = vmatpush2.msra.mxu0 0.0
    %225 = vmatprep.mubr.f32.mxu0 0.0
    %226 = vmatmul.mubr.f32.gmra.mxu0 %v156
    %v227 = vpop.f32.mrf.mxu0
    %v228 = vadd.f32 %v160, %v227
    %v229 = vpop.f32.mrf.mxu0
    %230 = vdwg.mxu0
    %v231 = vtanh.pop %v228
    %v232 = vlaneseq
    %v233 = vshrl.u32 %v232, 7
    %v234 = vsub.s32 0, %v233
    %v235 = vrot.slane %v77, %v234
    %236 = vmatprep.subr.mxu0 0.0
    %237 = vmatpush1.msra.mxu0 %v74
    %238 = vmatprep.subr.mxu0 0.0
    %239 = vmatpush1.msra.mxu0 %v73
    %240 = vmatprep.subr.mxu0 0.0
    %241 = vmatpush1.msra.mxu0 %v72
    %242 = vmatprep.subr.mxu0 0.0
    %243 = vmatpush1.msra.mxu0 %v71
    %244 = vmatprep.subr.mxu0 0.0
    %245 = vmatpush1.msra.mxu0 %v70
    %246 = vmatprep.subr.mxu0 0.0
    %247 = vmatpush1.msra.mxu0 %v69
    %248 = vmatprep.subr.mxu0 0.0
    %249 = vmatpush1.msra.mxu0 %v68
    %250 = vmatprep.subr.mxu0 0.0
    %251 = vmatpush1.msra.mxu0 %v67
    %252 = vmatprep.subr.mxu0 0.0
    %253 = vmatpush1.msra.mxu0 %v66
    %254 = vmatprep.subr.mxu0 0.0
    %255 = vmatpush1.msra.mxu0 %v65
    %256 = vmatprep.subr.mxu0 0.0
    %257 = vmatpush1.msra.mxu0 %v64
    %258 = vmatprep.subr.mxu0 0.0
    %259 = vmatpush1.msra.mxu0 %v63
    %260 = vmatprep.subr.mxu0 0.0
    %261 = vmatpush1.msra.mxu0 %v62
    %262 = vmatprep.subr.mxu0 0.0
    %263 = vmatpush1.msra.mxu0 %v61
    %264 = vmatprep.subr.mxu0 0.0
    %265 = vmatpush1.msra.mxu0 %v60
    %266 = vmatprep.subr.mxu0 0.0
    %267 = vmatpush1.msra.mxu0 %v59
    %268 = vmatprep.subr.mxu0 0.0
    %269 = vmatpush2.msra.mxu0 0.0
    %270 = vmatprep.subr.mxu0 0.0
    %271 = vmatpush2.msra.mxu0 0.0
    %272 = vmatprep.subr.mxu0 0.0
    %273 = vmatpush2.msra.mxu0 0.0
    %274 = vmatprep.subr.mxu0 0.0
    %275 = vmatpush2.msra.mxu0 0.0
    %276 = vmatprep.subr.mxu0 0.0
    %277 = vmatpush2.msra.mxu0 0.0
    %278 = vmatprep.subr.mxu0 0.0
    %279 = vmatpush2.msra.mxu0 0.0
    %280 = vmatprep.subr.mxu0 0.0
    %281 = vmatpush2.msra.mxu0 0.0
    %282 = vmatprep.subr.mxu0 0.0
    %283 = vmatpush2.msra.mxu0 0.0
    %284 = vmatprep.subr.mxu0 0.0
    %285 = vmatpush2.msra.mxu0 0.0
    %286 = vmatprep.subr.mxu0 0.0
    %287 = vmatpush2.msra.mxu0 0.0
    %288 = vmatprep.subr.mxu0 0.0
    %289 = vmatpush2.msra.mxu0 0.0
    %290 = vmatprep.subr.mxu0 0.0
    %291 = vmatpush2.msra.mxu0 0.0
    %292 = vmatprep.subr.mxu0 0.0
    %293 = vmatpush2.msra.mxu0 0.0
    %294 = vmatprep.subr.mxu0 0.0
    %295 = vmatpush2.msra.mxu0 0.0
    %296 = vmatprep.subr.mxu0 0.0
    %297 = vmatpush2.msra.mxu0 0.0
    %298 = vmatprep.subr.mxu0 0.0
    %299 = vmatpush2.msra.mxu0 0.0
    %300 = vmatprep.mubr.f32.mxu0 0.0
    %301 = vmatmul.mubr.f32.gmra.mxu0 %v231
    %v302 = vpop.f32.mrf.mxu0
    %v303 = vadd.f32 %v235, %v302
    %v304 = vpop.f32.mrf.mxu0
    %305 = vdwg.mxu0
    %vm306 = vcmask 64512
    %307 = vst.msk [vmem:[%s3] sm:$0xff] %vm306, %v303
    // Predicated region
    $region22: #{_policy_forward_impl.1} parent=1 // pred_check
      _
    $region23: #{_policy_forward_impl.1} parent=1 // pred_check_branch
      %309 = sbr.rel (0) target = $region25
    $region24: #{_policy_forward_impl.1} parent=1 // pred_region
      _
    $region25: #{_policy_forward_impl.1} parent=1 // pred_fallthru
      _
    // Predicated region
    $region26: #{_policy_forward_impl.1} parent=1 // pred_check
      _
    $region27: #{_policy_forward_impl.1} parent=1 // pred_check_branch
      %311 = sbr.rel (0) target = $region29
    $region28: #{_policy_forward_impl.1} parent=1 // pred_region
      _
    $region29: #{_policy_forward_impl.1} parent=1 // pred_fallthru
      _
    %312 = vsyncpa [#allocation3], 1
    %313 = vsyncpa [#allocation5], 1

</llo_original>
